<compile_context>
chip_gen: v7x
topology: tpu7x:2x2x1
jax: 0.10.0
libtpu: 0.0.40
codegen_flags: <defaults>
</compile_context>

<pallas_src>
import jax
import jax.numpy as jnp
from jax.experimental import pallas as pl
from jax.experimental.pallas import tpu as pltpu

IN_FEATURES = 20
HIDDEN = 256
OUT_FEATURES = 10
OUT_PADDED = 128          # lane-dense padded output width
DEFAULT_TILE_B = 512      # multiple of 128; sweep 512-2048 for large B


def _round_up(n, m):
    return ((n + m - 1) // m) * m


def mlp_kernel(x_ref, w1_ref, b1_ref, w2_ref, b2_ref, o_ref):
    # x:  (TILE_B, 20)          (f32 or bf16)
    # w1: (20, 256)  pre-transposed, same dtype as x
    # b1: (1, 256)   f32
    # w2: (256, 128) pre-transposed + zero-padded, same dtype as x
    # b2: (1, 128)   f32 (zero-padded)
    x = x_ref[...]

    # hidden = relu(x @ W1 + b1); MXU matmul with f32 accumulation,
    # bias-add / ReLU in f32 (v5e-friendly).
    h = jnp.dot(x, w1_ref[...], preferred_element_type=jnp.float32) + b1_ref[...]
    h = jnp.maximum(h, 0.0)

    # output = h @ W2 + b2 (cast h back to the matmul dtype; accumulate in f32).
    y = (
        jnp.dot(h.astype(w2_ref.dtype), w2_ref[...],
                preferred_element_type=jnp.float32)
        + b2_ref[...]
    )
    o_ref[...] = y.astype(o_ref.dtype)


def mlp_forward(x, w1, b1, w2, b2, *, tile_b=DEFAULT_TILE_B, compute_dtype=None):
    """PyTorch-semantics MLP forward.

    x:  (B, 20) f32
    w1: (256, 20), b1: (1, 256) or (256,)
    w2: (10, 256), b2: (1, 10) or (10,)
    compute_dtype: optional matmul-input dtype (e.g. jnp.bfloat16 on v6e/v7x);
                   accumulation and elementwise math stay f32.
    """
    B = x.shape[0]

    # --- one-time layout plumbing (outside the kernel) -----------------------
    w1t = w1.T                                        # (20, 256)
    w2t = w2.T                                        # (256, 10)
    w2t_pad = jnp.zeros((HIDDEN, OUT_PADDED), w2t.dtype).at[:, :OUT_FEATURES].set(w2t)
    b1_2d = jnp.asarray(b1, jnp.float32).reshape(1, HIDDEN)
    b2_pad = (
        jnp.zeros((1, OUT_PADDED), jnp.float32)
        .at[:, :OUT_FEATURES]
        .set(jnp.asarray(b2, jnp.float32).reshape(1, OUT_FEATURES))
    )

    if compute_dtype is not None:
        x = x.astype(compute_dtype)
        w1t = w1t.astype(compute_dtype)
        w2t_pad = w2t_pad.astype(compute_dtype)

    # --- batch tiling ---------------------------------------------------------
    tb = min(tile_b, _round_up(B, 8))     # sublane-aligned tile, <= tile_b
    b_pad = _round_up(B, tb)
    if b_pad != B:
        x = jnp.pad(x, ((0, b_pad - B), (0, 0)))
    grid = (b_pad // tb,)

    out = pl.pallas_call(
        mlp_kernel,
        out_shape=jax.ShapeDtypeStruct((b_pad, OUT_PADDED), jnp.float32),
        grid_spec=pltpu.PrefetchScalarGridSpec(
            num_scalar_prefetch=0,
            grid=grid,
            in_specs=[
                # streamed, double-buffered per batch tile
                pl.BlockSpec((tb, IN_FEATURES), lambda i: (i, 0)),
                # weights / biases: same block every step -> VMEM-resident
                pl.BlockSpec((IN_FEATURES, HIDDEN), lambda i: (0, 0)),
                pl.BlockSpec((1, HIDDEN), lambda i: (0, 0)),
                pl.BlockSpec((HIDDEN, OUT_PADDED), lambda i: (0, 0)),
                pl.BlockSpec((1, OUT_PADDED), lambda i: (0, 0)),
            ],
            out_specs=pl.BlockSpec((tb, OUT_PADDED), lambda i: (i, 0)),
        ),
        compiler_params=pltpu.CompilerParams(
            dimension_semantics=("parallel",),   # v7x: shard batch across 2 TCs
        ),
    )(x, w1t, b1_2d, w2t_pad, b2_pad)

    return out[:B, :OUT_FEATURES]


def init_params(key):
    # Deterministic init mimicking nn.Linear's uniform(-1/sqrt(fan_in), 1/sqrt(fan_in)).
    k1, k2, k3, k4 = jax.random.split(key, 4)
    bound1 = 1.0 / (IN_FEATURES ** 0.5)
    bound2 = 1.0 / (HIDDEN ** 0.5)
    w1 = jax.random.uniform(k1, (HIDDEN, IN_FEATURES), jnp.float32, -bound1, bound1)
    b1 = jax.random.uniform(k2, (1, HIDDEN), jnp.float32, -bound1, bound1)
    w2 = jax.random.uniform(k3, (OUT_FEATURES, HIDDEN), jnp.float32, -bound2, bound2)
    b2 = jax.random.uniform(k4, (1, OUT_FEATURES), jnp.float32, -bound2, bound2)
    return w1, b1, w2, b2


if __name__ == "__main__":
    key = jax.random.PRNGKey(0)
    kx, kp = jax.random.split(key)
    B = 2
    x = jax.random.normal(kx, (B, IN_FEATURES), jnp.float32)
    w1, b1, w2, b2 = init_params(kp)

    # f32 path (strict correctness check).
    out = jax.block_until_ready(mlp_forward(x, w1, b1, w2, b2))
    ref = jnp.maximum(x @ w1.T + b1, 0.0) @ w2.T + b2
    assert out.shape == (B, OUT_FEATURES)
    assert jnp.allclose(out, ref, atol=1e-5, rtol=1e-5)

    # bf16 matmul-input path (v6e/v7x streaming optimization), f32 accumulation.
    out_bf16 = jax.block_until_ready(
        mlp_forward(x, w1, b1, w2, b2, compute_dtype=jnp.bfloat16))
    assert out_bf16.shape == (B, OUT_FEATURES)
    assert jnp.allclose(out_bf16, ref, atol=5e-2, rtol=5e-2)

    print("KERNEL_OK")
</pallas_src>

<mosaic_0001>
module attributes {stable_mosaic.version = 11 : i64} {
  func.func @mlp_kernel(%arg0: i32, %arg1: memref<8x20xf32, #tpu.memory_space<vmem>>, %arg2: memref<20x256xf32, #tpu.memory_space<vmem>>, %arg3: memref<1x256xf32, #tpu.memory_space<vmem>>, %arg4: memref<256x128xf32, #tpu.memory_space<vmem>>, %arg5: memref<1x128xf32, #tpu.memory_space<vmem>>, %arg6: memref<8x128xf32, #tpu.memory_space<vmem>>) attributes {dimension_semantics = [#tpu.dimension_semantics<parallel>], iteration_bounds = array<i64: 1>, scalar_prefetch = 0 : i64, scratch_operands = 0 : i64, tpu.core_type = #tpu.core_type<tc>, window_params = [{transform_indices = @transform_0, window_bounds = array<i64: 8, 20>}, {pipeline_mode = #tpu.pipeline_mode<synchronous>, transform_indices = @transform_1, window_bounds = array<i64: 20, 256>}, {pipeline_mode = #tpu.pipeline_mode<synchronous>, transform_indices = @transform_2, window_bounds = array<i64: 1, 256>}, {pipeline_mode = #tpu.pipeline_mode<synchronous>, transform_indices = @transform_3, window_bounds = array<i64: 256, 128>}, {pipeline_mode = #tpu.pipeline_mode<synchronous>, transform_indices = @transform_4, window_bounds = array<i64: 1, 128>}, {transform_indices = @transform_5, window_bounds = array<i64: 8, 128>}]} {
    %c0 = arith.constant 0 : index
    %c0_0 = arith.constant 0 : index
    %0 = vector.load %arg1[%c0, %c0_0] : memref<8x20xf32, #tpu.memory_space<vmem>>, vector<8x20xf32>
    %c0_1 = arith.constant 0 : index
    %c0_2 = arith.constant 0 : index
    %1 = vector.load %arg2[%c0_1, %c0_2] : memref<20x256xf32, #tpu.memory_space<vmem>>, vector<20x256xf32>
    %cst = arith.constant dense<0.000000e+00> : vector<8x256xf32>
    %2 = tpu.matmul %0, %1, %cst {dimension_numbers = #tpu.dot_dimension_numbers<[1], [0], [0], [1], [0, 0, 1, 1], [], []>} : vector<8x20xf32>, vector<20x256xf32>, vector<8x256xf32> -> vector<8x256xf32>
    %c0_3 = arith.constant 0 : index
    %c0_4 = arith.constant 0 : index
    %3 = vector.load %arg3[%c0_3, %c0_4] : memref<1x256xf32, #tpu.memory_space<vmem>>, vector<1x256xf32>
    %4 = vector.broadcast %3 : vector<1x256xf32> to vector<8x256xf32>
    %5 = arith.addf %2, %4 : vector<8x256xf32>
    %cst_5 = arith.constant 0.000000e+00 : f32
    %6 = vector.broadcast %cst_5 : f32 to vector<8x256xf32>
    %7 = arith.maximumf %5, %6 : vector<8x256xf32>
    %c0_6 = arith.constant 0 : index
    %c0_7 = arith.constant 0 : index
    %8 = vector.load %arg4[%c0_6, %c0_7] : memref<256x128xf32, #tpu.memory_space<vmem>>, vector<256x128xf32>
    %cst_8 = arith.constant dense<0.000000e+00> : vector<8x128xf32>
    %9 = tpu.matmul %7, %8, %cst_8 {dimension_numbers = #tpu.dot_dimension_numbers<[1], [0], [0], [1], [0, 0, 1, 1], [], []>} : vector<8x256xf32>, vector<256x128xf32>, vector<8x128xf32> -> vector<8x128xf32>
    %c0_9 = arith.constant 0 : index
    %c0_10 = arith.constant 0 : index
    %10 = vector.load %arg5[%c0_9, %c0_10] : memref<1x128xf32, #tpu.memory_space<vmem>>, vector<1x128xf32>
    %11 = vector.broadcast %10 : vector<1x128xf32> to vector<8x128xf32>
    %12 = arith.addf %9, %11 : vector<8x128xf32>
    %c0_11 = arith.constant 0 : index
    %c0_12 = arith.constant 0 : index
    %13 = vector.load %arg6[%c0_11, %c0_12] : memref<8x128xf32, #tpu.memory_space<vmem>>, vector<8x128xf32>
    tpu.vector_store %arg6[%c0_11, %c0_12], %12 {strides = array<i32>} : memref<8x128xf32, #tpu.memory_space<vmem>>, vector<8x128xf32>,
    return
  }
  func.func @transform_0(%arg0: i32) -> (i32, i32) {
    %c0_i32 = arith.constant 0 : i32
    %c0_i32_0 = arith.constant 0 : i32
    return %arg0, %c0_i32 : i32, i32
  }
  func.func @transform_1(%arg0: i32) -> (i32, i32) {
    %c0_i32 = arith.constant 0 : i32
    %c0_i32_0 = arith.constant 0 : i32
    %c0_i32_1 = arith.constant 0 : i32
    return %c0_i32, %c0_i32_0 : i32, i32
  }
  func.func @transform_2(%arg0: i32) -> (i32, i32) {
    %c0_i32 = arith.constant 0 : i32
    %c0_i32_0 = arith.constant 0 : i32
    %c0_i32_1 = arith.constant 0 : i32
    return %c0_i32, %c0_i32_0 : i32, i32
  }
  func.func @transform_3(%arg0: i32) -> (i32, i32) {
    %c0_i32 = arith.constant 0 : i32
    %c0_i32_0 = arith.constant 0 : i32
    %c0_i32_1 = arith.constant 0 : i32
    return %c0_i32, %c0_i32_0 : i32, i32
  }
  func.func @transform_4(%arg0: i32) -> (i32, i32) {
    %c0_i32 = arith.constant 0 : i32
    %c0_i32_0 = arith.constant 0 : i32
    %c0_i32_1 = arith.constant 0 : i32
    return %c0_i32, %c0_i32_0 : i32, i32
  }
  func.func @transform_5(%arg0: i32) -> (i32, i32) {
    %c0_i32 = arith.constant 0 : i32
    %c0_i32_0 = arith.constant 0 : i32
    return %arg0, %c0_i32 : i32, i32
  }
}

</mosaic_0001>

<llo_original>
// kernel: tpu_custom_call.1
$region0: #{tpu_custom_call.1}
  #allocation0 [shape = 'u32[]', space=smem, size = 0x4, offset = 0x4, fixed_abs, tag = 'smem constant byte address 0x4 - core index']
  #allocation1 [shape = 'u32[144,128]{1,0:T(1,128)}', space=vmem, size = 0x12000, scoped, tag = 'internal scratch']
  %s0 = inlined_call_operand.hbm [shape: f32[8,20], index: 0, kind: input, shape index: {}]
  %s1 = inlined_call_operand.hbm [shape: f32[20,256], index: 1, kind: input, shape index: {}]
  %s2 = inlined_call_operand.vmem [shape: f32[1,256], index: 2, kind: input, shape index: {}]
  %s3 = inlined_call_operand.hbm [shape: f32[256,128], index: 3, kind: input, shape index: {}]
  %s4 = inlined_call_operand.vmem [shape: f32[1,128], index: 4, kind: input, shape index: {}]
  %s5 = inlined_call_operand.hbm [shape: f32[8,128], index: 5, kind: output, shape index: {}]
  %s6 = sld [smem:[#allocation0]]
  $region42: #{tpu_custom_call.1} parent=0
    _
  %s8 = ssub.s32 1, %s6
  %s9 = scalar_select 0, %s8, %s6
  $region1: #{tpu_custom_call.1} parent=0
    #allocation2 [shape = 'u8[4096]{0}', space=vmem, size = 0x1000, scoped, tag = 'input window, operand 0, single buffered']
    #allocation3 [shape = 's32[1]{0}', space=sflag, size = 0x4, scoped, tag = 'scoped memory for tpu_custom_call.1']
    #allocation4 [shape = 's32[1]{0}', space=sflag, size = 0x4, scoped, tag = 'scoped memory for tpu_custom_call.1']
    #allocation5 [shape = 'u8[24576]{0}', space=vmem, size = 0x6000, scoped, tag = 'input window, operand 1, single buffered']
    #allocation6 [shape = 's32[1]{0}', space=sflag, size = 0x4, scoped, tag = 'scoped memory for tpu_custom_call.1']
    #allocation7 [shape = 'u8[131072]{0}', space=vmem, size = 0x20000, scoped, tag = 'input window, operand 3, single buffered']
    #allocation8 [shape = 'u8[4096]{0}', space=vmem, size = 0x1000, scoped, tag = 'output window, operand 0, single buffered']
    %10 = vsyncpa [#allocation3], 0
    %11 = vsyncpa [#allocation6], 0
    %12 = vsyncpa [#allocation4], 0
    // Predicated region
    $region2: #{tpu_custom_call.1} parent=1 // pred_check
      _
    $region3: #{tpu_custom_call.1} parent=1 // pred_check_branch
      %14 = sbr.rel (0) target = $region5
    $region4: #{tpu_custom_call.1} parent=1 // pred_region
      %s16 = ssub.s32 128, 128
      %17 = vsyncadd [#allocation3], %s16
      %s19 = sshll.u32 [#allocation2], 4
      %s20 = int_to_ptr.vmem [resolvable:$true] %s19
      %22 = dma.hbm_to_vmem [thread:$0]  %s0, 128, %s20, [#allocation3]
    $region5: #{tpu_custom_call.1} parent=1 // pred_fallthru
      _
    // Predicated region
    $region6: #{tpu_custom_call.1} parent=1 // pred_check
      _
    $region7: #{tpu_custom_call.1} parent=1 // pred_check_branch
      %24 = sbr.rel (0) target = $region9
    $region8: #{tpu_custom_call.1} parent=1 // pred_region
      %s26 = ssub.s32 768, 768
      %27 = vsyncadd [#allocation6], %s26
      %s28 = sshll.u32 [#allocation5], 4
      %s29 = int_to_ptr.vmem [resolvable:$true] %s28
      %34 = dma.hbm_to_vmem [thread:$0]  %s1, 768, %s29, [#allocation6], 256, 256, 16
    $region9: #{tpu_custom_call.1} parent=1 // pred_fallthru
      _
    // Predicated region
    $region10: #{tpu_custom_call.1} parent=1 // pred_check
      _
    $region11: #{tpu_custom_call.1} parent=1 // pred_check_branch
      %36 = sbr.rel (0) target = $region13
    $region12: #{tpu_custom_call.1} parent=1 // pred_region
      _
    $region13: #{tpu_custom_call.1} parent=1 // pred_fallthru
      _
    // Predicated region
    $region14: #{tpu_custom_call.1} parent=1 // pred_check
      _
    $region15: #{tpu_custom_call.1} parent=1 // pred_check_branch
      %38 = sbr.rel (0) target = $region17
    $region16: #{tpu_custom_call.1} parent=1 // pred_region
      %s40 = ssub.s32 4096, 4096
      %41 = vsyncadd [#allocation6], %s40
      %s42 = sshll.u32 [#allocation7], 4
      %s43 = int_to_ptr.vmem [resolvable:$true] %s42
      %48 = dma.hbm_to_vmem [thread:$0]  %s3, 4096, %s43, [#allocation6], 128, 128, 8
    $region17: #{tpu_custom_call.1} parent=1 // pred_fallthru
      _
    // Predicated region
    $region18: #{tpu_custom_call.1} parent=1 // pred_check
      _
    $region19: #{tpu_custom_call.1} parent=1 // pred_check_branch
      %50 = sbr.rel (0) target = $region21
    $region20: #{tpu_custom_call.1} parent=1 // pred_region
      _
    $region21: #{tpu_custom_call.1} parent=1 // pred_fallthru
      _
    // Predicated region
    $region22: #{tpu_custom_call.1} parent=1 // pred_check
      _
    $region23: #{tpu_custom_call.1} parent=1 // pred_check_branch
      %52 = sbr.rel (0) target = $region25
    $region24: #{tpu_custom_call.1} parent=1 // pred_region
      %53 = dma.done [#allocation3], 128
    $region25: #{tpu_custom_call.1} parent=1 // pred_fallthru
      _
    // Predicated region
    $region26: #{tpu_custom_call.1} parent=1 // pred_check
      _
    $region27: #{tpu_custom_call.1} parent=1 // pred_check_branch
      %55 = sbr.rel (0) target = $region29
    $region28: #{tpu_custom_call.1} parent=1 // pred_region
      %56 = dma.done [#allocation6], 768
    $region29: #{tpu_custom_call.1} parent=1 // pred_fallthru
      _
    // Predicated region
    $region30: #{tpu_custom_call.1} parent=1 // pred_check
      _
    $region31: #{tpu_custom_call.1} parent=1 // pred_check_branch
      %58 = sbr.rel (0) target = $region33
    $region32: #{tpu_custom_call.1} parent=1 // pred_region
      %59 = dma.done [#allocation6], 4096
    $region33: #{tpu_custom_call.1} parent=1 // pred_fallthru
      _
    %v60 = vld [vmem:[#allocation2] sm:$0xff]
    %v61 = vld [vmem:[#allocation5] sm:$0xff]
    %v62 = vld [vmem:[#allocation5 + $0x8] sm:$0xff]
    %v63 = vld [vmem:[#allocation5 + $0x10] sm:$0xff]
    %v64 = vld [vmem:[#allocation5 + $0x18] sm:$0xff]
    %v65 = vld [vmem:[#allocation5 + $0x20] sm:$0xf]
    %v66 = vld [vmem:[#allocation5 + $0x28] sm:$0xf]
    %v67 = vld [vmem:[%s2] sm:$0x3]
    %v69 = vlaneseq
    %v70 = vshrl.u32 %v69, 7
    %v71 = vsub.s32 0, %v70
    %v72 = vrot.slane %v67, %v71
    %v73 = vlaneseq
    %v74 = vshrl.u32 %v73, 7
    %v75 = vsub.s32 1, %v74
    %v76 = vrot.slane %v67, %v75
    %vm79 = vcmask 162816
    %v81 = vsel %vm79, %v60, 0
    %vm83 = vcmask 1043456
    %v85 = vsel %vm83, %v65, 0
    %v88 = vsel %vm83, %v66, 0
    %90 = vmatprep.subr.mxu0 %v62
    %91 = vmatpush1.msra.mxu0 %v61
    %92 = vmatprep.subr.mxu0 %v64
    %93 = vmatpush1.msra.mxu0 %v63
    %94 = vmatprep.subr.mxu0 %v88
    %95 = vmatpush1.msra.mxu0 %v85
    %96 = vmatprep.subr.mxu0 0.0
    %97 = vmatpush1.msra.mxu0 0.0
    %98 = vmatprep.subr.mxu0 0.0
    %99 = vmatpush1.msra.mxu0 0.0
    %100 = vmatprep.subr.mxu0 0.0
    %101 = vmatpush1.msra.mxu0 0.0
    %102 = vmatprep.subr.mxu0 0.0
    %103 = vmatpush1.msra.mxu0 0.0
    %104 = vmatprep.subr.mxu0 0.0
    %105 = vmatpush1.msra.mxu0 0.0
    %106 = vmatprep.subr.mxu0 0.0
    %107 = vmatpush1.msra.mxu0 0.0
    %108 = vmatprep.subr.mxu0 0.0
    %109 = vmatpush1.msra.mxu0 0.0
    %110 = vmatprep.subr.mxu0 0.0
    %111 = vmatpush1.msra.mxu0 0.0
    %112 = vmatprep.subr.mxu0 0.0
    %113 = vmatpush1.msra.mxu0 0.0
    %114 = vmatprep.subr.mxu0 0.0
    %115 = vmatpush1.msra.mxu0 0.0
    %116 = vmatprep.subr.mxu0 0.0
    %117 = vmatpush1.msra.mxu0 0.0
    %118 = vmatprep.subr.mxu0 0.0
    %119 = vmatpush1.msra.mxu0 0.0
    %120 = vmatprep.subr.mxu0 0.0
    %121 = vmatpush1.msra.mxu0 0.0
    %122 = vmatprep.subr.mxu0 0.0
    %123 = vmatpush1.msra.mxu0 0.0
    %124 = vmatprep.subr.mxu0 0.0
    %125 = vmatpush1.msra.mxu0 0.0
    %126 = vmatprep.subr.mxu0 0.0
    %127 = vmatpush1.msra.mxu0 0.0
    %128 = vmatprep.subr.mxu0 0.0
    %129 = vmatpush1.msra.mxu0 0.0
    %130 = vmatprep.subr.mxu0 0.0
    %131 = vmatpush1.msra.mxu0 0.0
    %132 = vmatprep.subr.mxu0 0.0
    %133 = vmatpush1.msra.mxu0 0.0
    %134 = vmatprep.subr.mxu0 0.0
    %135 = vmatpush1.msra.mxu0 0.0
    %136 = vmatprep.subr.mxu0 0.0
    %137 = vmatpush1.msra.mxu0 0.0
    %138 = vmatprep.subr.mxu0 0.0
    %139 = vmatpush1.msra.mxu0 0.0
    %140 = vmatprep.subr.mxu0 0.0
    %141 = vmatpush1.msra.mxu0 0.0
    %142 = vmatprep.subr.mxu0 0.0
    %143 = vmatpush1.msra.mxu0 0.0
    %144 = vmatprep.subr.mxu0 0.0
    %145 = vmatpush1.msra.mxu0 0.0
    %146 = vmatprep.subr.mxu0 0.0
    %147 = vmatpush1.msra.mxu0 0.0
    %148 = vmatprep.subr.mxu0 0.0
    %149 = vmatpush1.msra.mxu0 0.0
    %150 = vmatprep.subr.mxu0 0.0
    %151 = vmatpush1.msra.mxu0 0.0
    %152 = vmatprep.subr.mxu0 0.0
    %153 = vmatpush1.msra.mxu0 0.0
    %154 = vmatprep.mubr.f32.mxu0 0.0
    %155 = vmatmul.mubr.f32.gmra.mrb[0].mxu0 %v81
    %v156 = vpop.f32.mrb[0].mxu0
    %v157 = vadd.f32 %v72, %v156
    %v158 = vpop.f32.mrb[0].mxu0
    %v159 = vadd.f32 %v76, %v158
    %160 = vdwg.mxu0
    %v161 = vmax.f32 %v157, 0.0
    %v162 = vmax.f32 %v159, 0.0
    %v163 = vld [vmem:[#allocation7] sm:$0xff]
    %v164 = vld [vmem:[#allocation7 + $0x8] sm:$0xff]
    %v165 = vld [vmem:[#allocation7 + $0x10] sm:$0xff]
    %v166 = vld [vmem:[#allocation7 + $0x18] sm:$0xff]
    %v167 = vld [vmem:[#allocation7 + $0x20] sm:$0xff]
    %v168 = vld [vmem:[#allocation7 + $0x28] sm:$0xff]
    %v169 = vld [vmem:[#allocation7 + $0x30] sm:$0xff]
    %v170 = vld [vmem:[#allocation7 + $0x38] sm:$0xff]
    %v171 = vld [vmem:[#allocation7 + $0x40] sm:$0xff]
    %v172 = vld [vmem:[#allocation7 + $0x48] sm:$0xff]
    %v173 = vld [vmem:[#allocation7 + $0x50] sm:$0xff]
    %v174 = vld [vmem:[#allocation7 + $0x58] sm:$0xff]
    %v175 = vld [vmem:[#allocation7 + $0x60] sm:$0xff]
    %v176 = vld [vmem:[#allocation7 + $0x68] sm:$0xff]
    %v177 = vld [vmem:[#allocation7 + $0x70] sm:$0xff]
    %v178 = vld [vmem:[#allocation7 + $0x78] sm:$0xff]
    %v179 = vld [vmem:[#allocation7 + $0x80] sm:$0xff]
    %v180 = vld [vmem:[#allocation7 + $0x88] sm:$0xff]
    %v181 = vld [vmem:[#allocation7 + $0x90] sm:$0xff]
    %v182 = vld [vmem:[#allocation7 + $0x98] sm:$0xff]
    %v183 = vld [vmem:[#allocation7 + $0xa0] sm:$0xff]
    %v184 = vld [vmem:[#allocation7 + $0xa8] sm:$0xff]
    %v185 = vld [vmem:[#allocation7 + $0xb0] sm:$0xff]
    %v186 = vld [vmem:[#allocation7 + $0xb8] sm:$0xff]
    %v187 = vld [vmem:[#allocation7 + $0xc0] sm:$0xff]
    %v188 = vld [vmem:[#allocation7 + $0xc8] sm:$0xff]
    %v189 = vld [vmem:[#allocation7 + $0xd0] sm:$0xff]
    %v190 = vld [vmem:[#allocation7 + $0xd8] sm:$0xff]
    %v191 = vld [vmem:[#allocation7 + $0xe0] sm:$0xff]
    %v192 = vld [vmem:[#allocation7 + $0xe8] sm:$0xff]
    %v193 = vld [vmem:[#allocation7 + $0xf0] sm:$0xff]
    %v194 = vld [vmem:[#allocation7 + $0xf8] sm:$0xff]
    %v195 = vld [vmem:[%s4] sm:$0x1]
    %v197 = vlaneseq
    %v198 = vshrl.u32 %v197, 7
    %v199 = vsub.s32 0, %v198
    %v200 = vrot.slane %v195, %v199
    %202 = vmatprep.subr.mxu0 0.0
    %203 = vmatpush1.msra.mxu0 %v163
    %204 = vmatprep.subr.mxu0 0.0
    %205 = vmatpush1.msra.mxu0 %v164
    %206 = vmatprep.subr.mxu0 0.0
    %207 = vmatpush1.msra.mxu0 %v165
    %208 = vmatprep.subr.mxu0 0.0
    %209 = vmatpush1.msra.mxu0 %v166
    %210 = vmatprep.subr.mxu0 0.0
    %211 = vmatpush1.msra.mxu0 %v167
    %212 = vmatprep.subr.mxu0 0.0
    %213 = vmatpush1.msra.mxu0 %v168
    %214 = vmatprep.subr.mxu0 0.0
    %215 = vmatpush1.msra.mxu0 %v169
    %216 = vmatprep.subr.mxu0 0.0
    %217 = vmatpush1.msra.mxu0 %v170
    %218 = vmatprep.subr.mxu0 0.0
    %219 = vmatpush1.msra.mxu0 %v171
    %220 = vmatprep.subr.mxu0 0.0
    %221 = vmatpush1.msra.mxu0 %v172
    %222 = vmatprep.subr.mxu0 0.0
    %223 = vmatpush1.msra.mxu0 %v173
    %224 = vmatprep.subr.mxu0 0.0
    %225 = vmatpush1.msra.mxu0 %v174
    %226 = vmatprep.subr.mxu0 0.0
    %227 = vmatpush1.msra.mxu0 %v175
    %228 = vmatprep.subr.mxu0 0.0
    %229 = vmatpush1.msra.mxu0 %v176
    %230 = vmatprep.subr.mxu0 0.0
    %231 = vmatpush1.msra.mxu0 %v177
    %232 = vmatprep.subr.mxu0 0.0
    %233 = vmatpush1.msra.mxu0 %v178
    %234 = vmatprep.subr.mxu0 0.0
    %235 = vmatpush1.msra.mxu0 %v179
    %236 = vmatprep.subr.mxu0 0.0
    %237 = vmatpush1.msra.mxu0 %v180
    %238 = vmatprep.subr.mxu0 0.0
    %239 = vmatpush1.msra.mxu0 %v181
    %240 = vmatprep.subr.mxu0 0.0
    %241 = vmatpush1.msra.mxu0 %v182
    %242 = vmatprep.subr.mxu0 0.0
    %243 = vmatpush1.msra.mxu0 %v183
    %244 = vmatprep.subr.mxu0 0.0
    %245 = vmatpush1.msra.mxu0 %v184
    %246 = vmatprep.subr.mxu0 0.0
    %247 = vmatpush1.msra.mxu0 %v185
    %248 = vmatprep.subr.mxu0 0.0
    %249 = vmatpush1.msra.mxu0 %v186
    %250 = vmatprep.subr.mxu0 0.0
    %251 = vmatpush1.msra.mxu0 %v187
    %252 = vmatprep.subr.mxu0 0.0
    %253 = vmatpush1.msra.mxu0 %v188
    %254 = vmatprep.subr.mxu0 0.0
    %255 = vmatpush1.msra.mxu0 %v189
    %256 = vmatprep.subr.mxu0 0.0
    %257 = vmatpush1.msra.mxu0 %v190
    %258 = vmatprep.subr.mxu0 0.0
    %259 = vmatpush1.msra.mxu0 %v191
    %260 = vmatprep.subr.mxu0 0.0
    %261 = vmatpush1.msra.mxu0 %v192
    %262 = vmatprep.subr.mxu0 0.0
    %263 = vmatpush1.msra.mxu0 %v193
    %264 = vmatprep.subr.mxu0 0.0
    %265 = vmatpush1.msra.mxu0 %v194
    %266 = vmatprep.mubr.f32.mxu0 %v162
    %267 = vmatmul.mubr.f32.gmra.mrb[0].mxu0 %v161
    %v268 = vpop.f32.mrb[0].mxu0
    %v269 = vadd.f32 %v200, %v268
    %v270 = vpop.f32.mrb[0].mxu0
    %271 = vdwg.mxu0
    %272 = vst [vmem:[#allocation8] sm:$0xff] %v269
    // Predicated region
    $region34: #{tpu_custom_call.1} parent=1 // pred_check
      _
    $region35: #{tpu_custom_call.1} parent=1 // pred_check_branch
      %274 = sbr.rel (0) target = $region37
    $region36: #{tpu_custom_call.1} parent=1 // pred_region
      %s276 = ssub.s32 128, 128
      %277 = vsyncadd [#allocation4], %s276
      %s279 = sshll.u32 [#allocation8], 4
      %s280 = int_to_ptr.vmem [resolvable:$true] %s279
      %282 = dma.vmem_to_hbm [thread:$0]  %s280, 128, %s5, [#allocation4]
    $region37: #{tpu_custom_call.1} parent=1 // pred_fallthru
      _
    // Predicated region
    $region38: #{tpu_custom_call.1} parent=1 // pred_check
      _
    $region39: #{tpu_custom_call.1} parent=1 // pred_check_branch
      %284 = sbr.rel (0) target = $region41
    $region40: #{tpu_custom_call.1} parent=1 // pred_region
      %285 = dma.done [#allocation4], 128
    $region41: #{tpu_custom_call.1} parent=1 // pred_fallthru
      _
    %286 = vsyncpa [#allocation3], 1
    %287 = vsyncpa [#allocation6], 1
    %288 = vsyncpa [#allocation4], 1

</llo_original>
